<compile_context>
chip_gen: v7x
topology: tpu7x:2x2x1
jax: 0.10.0
libtpu: 0.0.40
codegen_flags: <defaults>
</compile_context>

<pallas_src>
import jax
import jax.numpy as jnp
from jax.experimental import pallas as pl
from jax.experimental.pallas import tpu as pltpu

SUBLANES = 8
LANES = 128


def _str_passthrough_kernel(x_ref, name_ref, out_ref):
    # forward(*args, **kwargs): ignore all inputs, return the stored constant.
    # x_ref is a raw HBM ref (memory_space=pl.ANY) and is intentionally never
    # read -> zero data movement for it.
    del x_ref
    out_ref[...] = name_ref[...]


def encode_name(name: str) -> jnp.ndarray:
    """Deterministically encode the stored string as one (8,128) int32 tile."""
    codes = [ord(c) for c in name]
    assert len(codes) <= SUBLANES * LANES, "name too long for one tile"
    buf = codes + [0] * (SUBLANES * LANES - len(codes))
    return jnp.asarray(buf, dtype=jnp.int32).reshape(SUBLANES, LANES)


def decode_name(codes: jax.Array) -> str:
    flat = jax.device_get(codes).reshape(-1)
    chars = [chr(int(c)) for c in flat if int(c) != 0]
    return "".join(chars)


def str_module_forward(x: jax.Array, name_codes: jax.Array) -> jax.Array:
    """Pallas equivalent of StrModule.forward: ignores x, returns the constant."""
    return pl.pallas_call(
        _str_passthrough_kernel,
        out_shape=jax.ShapeDtypeStruct(name_codes.shape, name_codes.dtype),
        # No grid: a 1-step grid would only add pipeline prologue/epilogue
        # overhead for a 4 KiB constant copy.
        in_specs=[
            # x: kept only for API parity with forward(*args); stays in HBM,
            # never DMA'd, never read.
            pl.BlockSpec(memory_space=pl.ANY),
            # name constant: whole (8,128) int32 tile resident in VMEM.
            pl.BlockSpec(memory_space=pltpu.MemorySpace.VMEM),
        ],
        out_specs=pl.BlockSpec(memory_space=pltpu.MemorySpace.VMEM),
        # Alias the constant buffer to the output: no separate output
        # allocation / write-back for the identity pass-through.
        input_output_aliases={1: 0},
    )(x, name_codes)


if __name__ == "__main__":
    key = jax.random.PRNGKey(0)

    # The stored constant from __init__(lambd) — deterministic, in-script.
    lambd = "gcn_conv"
    name_codes = encode_name(lambd)

    # Example "input" (ignored by forward, just like *args in PyTorch).
    x = jax.random.normal(key, (2, 4, 16, 16), dtype=jnp.float32)

    out = str_module_forward(x, name_codes)
    out = jax.block_until_ready(out)

    # Verify pass-through semantics: output decodes back to the stored name.
    assert decode_name(out) == lambd, decode_name(out)

    print("KERNEL_OK")
</pallas_src>

<mosaic_0001>
module attributes {stable_mosaic.version = 11 : i64} {
  func.func @_str_passthrough_kernel(%arg0: memref<2x4x16x16xf32, #tpu.memory_space<any>>, %arg1: memref<8x128xi32, #tpu.memory_space<vmem>>, %arg2: memref<8x128xi32, #tpu.memory_space<vmem>>) attributes {dimension_semantics = [], scalar_prefetch = 0 : i64, scratch_operands = 0 : i64, tpu.core_type = #tpu.core_type<tc>} {
    %c0 = arith.constant 0 : index
    %c0_0 = arith.constant 0 : index
    %0 = vector.load %arg1[%c0, %c0_0] : memref<8x128xi32, #tpu.memory_space<vmem>>, vector<8x128xi32>
    %c0_1 = arith.constant 0 : index
    %c0_2 = arith.constant 0 : index
    %1 = vector.load %arg2[%c0_1, %c0_2] : memref<8x128xi32, #tpu.memory_space<vmem>>, vector<8x128xi32>
    tpu.vector_store %arg2[%c0_1, %c0_2], %0 {strides = array<i32>} : memref<8x128xi32, #tpu.memory_space<vmem>>, vector<8x128xi32>,
    return
  }
}

</mosaic_0001>

<llo_original>
// kernel: tpu_custom_call.1
$region0: #{tpu_custom_call.1}
  #allocation0 [shape = 'u32[]', space=smem, size = 0x4, offset = 0x4, fixed_abs, tag = 'smem constant byte address 0x4 - core index']
  #allocation1 [shape = 'u32[144,128]{1,0:T(1,128)}', space=vmem, size = 0x12000, scoped, tag = 'internal scratch']
  %s0 = inlined_call_operand.hbm [shape: f32[2,4,16,16], index: 0, kind: input, shape index: {}]
  %s1 = inlined_call_operand.hbm [shape: s32[8,128], index: 1, kind: input, shape index: {}, may-alias: {1,2}]
  %s2 = inlined_call_operand.hbm [shape: s32[8,128], index: 2, kind: output, shape index: {}, may-alias: {1,2}]
  %s3 = sld [smem:[#allocation0]]
  $region18: #{tpu_custom_call.1} parent=0
    _
  %s5 = ssub.s32 1, %s3
  %s6 = scalar_select 0, %s5, %s3
  $region1: #{tpu_custom_call.1} parent=0
    #allocation2 [shape = 'u8[4096]{0}', space=vmem, size = 0x1000, scoped, tag = 'input window, operand 1, single buffered']
    #allocation3 [shape = 's32[1]{0}', space=sflag, size = 0x4, scoped, tag = 'scoped memory for tpu_custom_call.1']
    #allocation4 [shape = 's32[1]{0}', space=sflag, size = 0x4, scoped, tag = 'scoped memory for tpu_custom_call.1']
    #allocation5 [shape = 'u8[4096]{0}', space=vmem, size = 0x1000, scoped, tag = 'output window, operand 0, single buffered']
    %7 = vsyncpa [#allocation3], 0
    %8 = vsyncpa [#allocation4], 0
    // Predicated region
    $region2: #{tpu_custom_call.1} parent=1 // pred_check
      _
    $region3: #{tpu_custom_call.1} parent=1 // pred_check_branch
      %10 = sbr.rel (0) target = $region5
    $region4: #{tpu_custom_call.1} parent=1 // pred_region
      %s12 = ssub.s32 128, 128
      %13 = vsyncadd [#allocation3], %s12
      %s15 = sshll.u32 [#allocation2], 4
      %s16 = int_to_ptr.vmem [resolvable:$true] %s15
      %18 = dma.hbm_to_vmem [thread:$0]  %s1, 128, %s16, [#allocation3]
    $region5: #{tpu_custom_call.1} parent=1 // pred_fallthru
      _
    // Predicated region
    $region6: #{tpu_custom_call.1} parent=1 // pred_check
      _
    $region7: #{tpu_custom_call.1} parent=1 // pred_check_branch
      %20 = sbr.rel (0) target = $region9
    $region8: #{tpu_custom_call.1} parent=1 // pred_region
      %21 = dma.done [#allocation3], 128
    $region9: #{tpu_custom_call.1} parent=1 // pred_fallthru
      _
    %v22 = vld [vmem:[#allocation2] sm:$0xff]
    %23 = vst [vmem:[#allocation5] sm:$0xff] %v22
    // Predicated region
    $region10: #{tpu_custom_call.1} parent=1 // pred_check
      _
    $region11: #{tpu_custom_call.1} parent=1 // pred_check_branch
      %25 = sbr.rel (0) target = $region13
    $region12: #{tpu_custom_call.1} parent=1 // pred_region
      %s27 = ssub.s32 128, 128
      %28 = vsyncadd [#allocation4], %s27
      %s30 = sshll.u32 [#allocation5], 4
      %s31 = int_to_ptr.vmem [resolvable:$true] %s30
      %33 = dma.vmem_to_hbm [thread:$0]  %s31, 128, %s2, [#allocation4]
    $region13: #{tpu_custom_call.1} parent=1 // pred_fallthru
      _
    // Predicated region
    $region14: #{tpu_custom_call.1} parent=1 // pred_check
      _
    $region15: #{tpu_custom_call.1} parent=1 // pred_check_branch
      %35 = sbr.rel (0) target = $region17
    $region16: #{tpu_custom_call.1} parent=1 // pred_region
      %36 = dma.done [#allocation4], 128
    $region17: #{tpu_custom_call.1} parent=1 // pred_fallthru
      _
    %37 = vsyncpa [#allocation3], 1
    %38 = vsyncpa [#allocation4], 1

</llo_original>
